<compile_context>
chip_gen: v5e
topology: v5e:2x2
jax: 0.10.0
libtpu: 0.0.40
codegen_flags: <defaults>
</compile_context>

<pallas_src>
import jax
import jax.numpy as jnp
from jax import lax
from jax.experimental import pallas as pl
from jax.experimental.pallas import tpu as pltpu


_LANE = 128
_NEG_FILL = -1e9          # sigmoid(-1e9) == 0.0 exactly in f32 -> padding is inert
_MAX_TS = 65536           # cap on spatial tile (lanes)
_ACC_LANES = 512          # max lane width of the partial-sum accumulators
_TILE_VMEM_BUDGET = 16 * 1024 * 1024   # 2 inputs x 2 pipeline buffers


def _gdl_partial_kernel(logits_ref, targets_ref, inter_ref, psum_ref, gsum_ref):
    """Accumulate per-row lane-partial sums (inter, pred-sum, target-sum).

    logits_ref / targets_ref : (R, TS)        one spatial tile, R = padded N*C
    inter/psum/gsum refs     : (1, R, ACC_L)  accumulators, resident across the
                                              'arbitrary' (spatial) grid axis.
    TS is guaranteed to be a multiple of ACC_L by the wrapper.
    """
    s = pl.program_id(1)

    @pl.when(s == 0)
    def _init():
        inter_ref[...] = jnp.zeros_like(inter_ref)
        psum_ref[...] = jnp.zeros_like(psum_ref)
        gsum_ref[...] = jnp.zeros_like(gsum_ref)

    acc_l = inter_ref.shape[-1]                  # multiple of 128
    chunks = logits_ref.shape[-1] // acc_l       # static, exact (no remainder)

    def body(k, carry):
        i_acc, p_acc, g_acc = carry
        off = pl.multiple_of(k * acc_l, acc_l)
        xk = logits_ref[:, pl.ds(off, acc_l)].astype(jnp.float32)
        tk = targets_ref[:, pl.ds(off, acc_l)].astype(jnp.float32)
        pk = jax.nn.sigmoid(xk)                  # EUP transcendental (free slot)
        # VPU-only accumulation; no cross-lane XLU reduce in the hot loop.
        return (i_acc + pk * tk, p_acc + pk, g_acc + tk)

    i_acc, p_acc, g_acc = lax.fori_loop(
        0, chunks, body,
        (inter_ref[0, :, :], psum_ref[0, :, :], gsum_ref[0, :, :]),
        unroll=min(chunks, 8))

    inter_ref[0, :, :] = i_acc
    psum_ref[0, :, :] = p_acc
    gsum_ref[0, :, :] = g_acc


def _sublane_multiple(dtype):
    # f32 -> 8, bf16/f16 -> 16, int8/bool -> 32 (sub-32-bit packs along sublanes)
    return max(8, 32 // jnp.dtype(dtype).itemsize)


def generalised_dice_loss(logits, targets, eps=1e-6, max_tile_lanes=_MAX_TS):
    """Pallas implementation of GeneralisedDiceLoss.forward (returns scalar)."""
    assert logits.shape == targets.shape
    N, C = logits.shape[0], logits.shape[1]
    S = 1
    for d in logits.shape[2:]:
        S *= d
    R = N * C

    logits_f = jnp.reshape(logits, (R, S))
    targets_f = jnp.reshape(targets, (R, S))

    # --- row (sublane) padding: full vreg occupancy for any dtype -----------
    row_mult = max(_sublane_multiple(logits.dtype), _sublane_multiple(targets.dtype))
    r_pad = ((R + row_mult - 1) // row_mult) * row_mult

    # --- spatial tile: largest 128-multiple within the VMEM budget ----------
    bytes_per_lane = (jnp.dtype(logits.dtype).itemsize
                      + jnp.dtype(targets.dtype).itemsize)
    max_tile_lanes = max(_LANE, (int(max_tile_lanes) // _LANE) * _LANE)
    ts = _TILE_VMEM_BUDGET // (2 * r_pad * bytes_per_lane)   # 2 pipeline buffers
    ts = max(_LANE, (ts // _LANE) * _LANE)
    ts = min(ts, max_tile_lanes, _MAX_TS)
    s_ceil = ((S + _LANE - 1) // _LANE) * _LANE
    ts = min(ts, s_ceil)                                     # never bigger than needed

    # Accumulator lane width: largest 128-multiple <= _ACC_LANES that divides
    # the tile exactly, so the in-kernel chunk loop covers every lane.
    acc_l = _LANE
    for cand in range(min(_ACC_LANES, ts), _LANE - 1, -_LANE):
        if ts % cand == 0:
            acc_l = cand
            break

    n_tiles = -(-S // ts)

    # --- split reduction over 2 'parallel' partitions (both v7x TCs) --------
    # Only when the extra padding is small; neutral on single-TC chips.
    p_parts = 2 if (n_tiles >= 2 and (n_tiles % 2 == 0 or n_tiles >= 8)) else 1
    tiles_per_part = -(-n_tiles // p_parts)
    s_pad = p_parts * tiles_per_part * ts

    if r_pad != R or s_pad != S:
        logits_f = jnp.pad(logits_f, ((0, r_pad - R), (0, s_pad - S)),
                           constant_values=_NEG_FILL)        # sigmoid -> 0 exactly
        targets_f = jnp.pad(targets_f, ((0, r_pad - R), (0, s_pad - S)),
                            constant_values=0)

    in_map = lambda p, s: (0, p * tiles_per_part + s)
    out_map = lambda p, s: (p, 0, 0)

    acc_shape = jax.ShapeDtypeStruct((p_parts, r_pad, acc_l), jnp.float32)
    acc_spec = pl.BlockSpec((1, r_pad, acc_l), out_map)

    inter_p, psum_p, gsum_p = pl.pallas_call(
        _gdl_partial_kernel,
        out_shape=(acc_shape, acc_shape, acc_shape),
        grid_spec=pltpu.PrefetchScalarGridSpec(
            num_scalar_prefetch=0,
            grid=(p_parts, tiles_per_part),
            in_specs=[
                pl.BlockSpec((r_pad, ts), in_map),
                pl.BlockSpec((r_pad, ts), in_map),
            ],
            out_specs=(acc_spec, acc_spec, acc_spec),
        ),
        compiler_params=pltpu.CompilerParams(
            dimension_semantics=("parallel", "arbitrary"),
            vmem_limit_bytes=32 * 1024 * 1024,
        ),
    )(logits_f, targets_f)

    # --- tiny finalize in plain JAX (N*C values) -----------------------------
    inter = inter_p.sum(axis=(0, 2))[:R].reshape(N, C)
    psum = psum_p.sum(axis=(0, 2))[:R].reshape(N, C)
    gsum = gsum_p.sum(axis=(0, 2))[:R].reshape(N, C)

    w = 1.0 / (gsum * gsum + eps)
    num = jnp.sum(w * inter, axis=1)
    den = jnp.sum(w * (psum + gsum), axis=1)
    gdl = 1.0 - 2.0 * num / (den + eps)
    return jnp.mean(gdl)


def _reference(logits, targets, eps=1e-6):
    preds = jax.nn.sigmoid(logits.astype(jnp.float32))
    N, C = logits.shape[0], logits.shape[1]
    preds = preds.reshape(N, C, -1)
    tgt = targets.astype(jnp.float32).reshape(N, C, -1)
    gsum = tgt.sum(-1)
    w = 1.0 / (gsum ** 2 + eps)
    inter = (preds * tgt).sum(-1)
    num = (w * inter).sum(1)
    den = (w * (preds.sum(-1) + gsum)).sum(1)
    gdl = 1.0 - 2.0 * num / (den + eps)
    return gdl.mean()


if __name__ == "__main__":
    key = jax.random.PRNGKey(0)

    # Case 1: nicely shaped (no padding path, single tile).
    k1, k2, key = jax.random.split(key, 3)
    N, C, H, W = 2, 4, 16, 16
    logits = jax.random.normal(k1, (N, C, H, W), dtype=jnp.float32)
    targets = (jax.random.uniform(k2, (N, C, H, W)) > 0.5).astype(jnp.float32)

    loss = jax.block_until_ready(generalised_dice_loss(logits, targets))
    ref = _reference(logits, targets)
    assert jnp.allclose(loss, ref, atol=1e-5, rtol=1e-5), (loss, ref)

    # Case 2: odd shape -> exercises row + spatial padding path.
    k3, k4, key = jax.random.split(key, 3)
    N2, C2, H2, W2 = 2, 3, 7, 9
    logits2 = jax.random.normal(k3, (N2, C2, H2, W2), dtype=jnp.float32)
    targets2 = (jax.random.uniform(k4, (N2, C2, H2, W2)) > 0.5).astype(jnp.float32)

    loss2 = jax.block_until_ready(generalised_dice_loss(logits2, targets2))
    ref2 = _reference(logits2, targets2)
    assert jnp.allclose(loss2, ref2, atol=1e-5, rtol=1e-5), (loss2, ref2)

    # Case 3: tile not a multiple of 512 -> exercises the multi-chunk loop
    # (the tail-lane bug fixed in this version).
    k5, k6, key = jax.random.split(key, 3)
    N3, C3, H3, W3 = 1, 2, 18, 35     # S = 630 -> tile 640 -> acc_l 128, 5 chunks
    logits3 = jax.random.normal(k5, (N3, C3, H3, W3), dtype=jnp.float32)
    targets3 = (jax.random.uniform(k6, (N3, C3, H3, W3)) > 0.5).astype(jnp.float32)

    loss3 = jax.block_until_ready(generalised_dice_loss(logits3, targets3))
    ref3 = _reference(logits3, targets3)
    assert jnp.allclose(loss3, ref3, atol=1e-5, rtol=1e-5), (loss3, ref3)

    # Case 4: force several grid steps (max_tile_lanes=256) -> exercises the
    # multi-tile 'arbitrary' accumulation and the 2-way 'parallel' split.
    k7, k8, key = jax.random.split(key, 3)
    N4, C4, H4, W4 = 2, 3, 32, 32     # S = 1024 -> 4 tiles of 256, 2 partitions
    logits4 = jax.random.normal(k7, (N4, C4, H4, W4), dtype=jnp.float32)
    targets4 = (jax.random.uniform(k8, (N4, C4, H4, W4)) > 0.5).astype(jnp.float32)

    loss4 = jax.block_until_ready(
        generalised_dice_loss(logits4, targets4, max_tile_lanes=256))
    ref4 = _reference(logits4, targets4)
    assert jnp.allclose(loss4, ref4, atol=1e-5, rtol=1e-5), (loss4, ref4)

    print("KERNEL_OK")
</pallas_src>

<mosaic_0001>
module attributes {stable_mosaic.version = 11 : i64} {
  func.func @_gdl_partial_kernel(%arg0: i32, %arg1: i32, %arg2: memref<8x256xf32, #tpu.memory_space<vmem>>, %arg3: memref<8x256xf32, #tpu.memory_space<vmem>>, %arg4: memref<1x8x256xf32, #tpu.memory_space<vmem>>, %arg5: memref<1x8x256xf32, #tpu.memory_space<vmem>>, %arg6: memref<1x8x256xf32, #tpu.memory_space<vmem>>) attributes {dimension_semantics = [#tpu.dimension_semantics<parallel>, #tpu.dimension_semantics<arbitrary>], iteration_bounds = array<i64: 1, 1>, scalar_prefetch = 0 : i64, scratch_operands = 0 : i64, tpu.core_type = #tpu.core_type<tc>, window_params = [{transform_indices = @transform_0, window_bounds = array<i64: 8, 256>}, {transform_indices = @transform_1, window_bounds = array<i64: 8, 256>}, {transform_indices = @transform_2, window_bounds = array<i64: 1, 8, 256>}, {transform_indices = @transform_3, window_bounds = array<i64: 1, 8, 256>}, {transform_indices = @transform_4, window_bounds = array<i64: 1, 8, 256>}]} {
    %c0_i32 = arith.constant 0 : i32
    %0 = arith.cmpi eq, %arg1, %c0_i32 : i32
    %1 = arith.extui %0 : i1 to i32
    %c0_i32_0 = arith.constant 0 : i32
    %2 = arith.cmpi ne, %1, %c0_i32_0 : i32
    scf.if %2 {
      %cst_21 = arith.constant 0.000000e+00 : f32
      %33 = vector.broadcast %cst_21 : f32 to vector<1x8x256xf32>
      %c0_22 = arith.constant 0 : index
      %c0_23 = arith.constant 0 : index
      %c0_24 = arith.constant 0 : index
      %34 = vector.load %arg4[%c0_22, %c0_23, %c0_24] : memref<1x8x256xf32, #tpu.memory_space<vmem>>, vector<1x8x256xf32>
      tpu.vector_store %arg4[%c0_22, %c0_23, %c0_24], %33 {strides = array<i32>} : memref<1x8x256xf32, #tpu.memory_space<vmem>>, vector<1x8x256xf32>,
      %cst_25 = arith.constant 0.000000e+00 : f32
      %35 = vector.broadcast %cst_25 : f32 to vector<1x8x256xf32>
      %c0_26 = arith.constant 0 : index
      %c0_27 = arith.constant 0 : index
      %c0_28 = arith.constant 0 : index
      %36 = vector.load %arg5[%c0_26, %c0_27, %c0_28] : memref<1x8x256xf32, #tpu.memory_space<vmem>>, vector<1x8x256xf32>
      tpu.vector_store %arg5[%c0_26, %c0_27, %c0_28], %35 {strides = array<i32>} : memref<1x8x256xf32, #tpu.memory_space<vmem>>, vector<1x8x256xf32>,
      %cst_29 = arith.constant 0.000000e+00 : f32
      %37 = vector.broadcast %cst_29 : f32 to vector<1x8x256xf32>
      %c0_30 = arith.constant 0 : index
      %c0_31 = arith.constant 0 : index
      %c0_32 = arith.constant 0 : index
      %38 = vector.load %arg6[%c0_30, %c0_31, %c0_32] : memref<1x8x256xf32, #tpu.memory_space<vmem>>, vector<1x8x256xf32>
      tpu.vector_store %arg6[%c0_30, %c0_31, %c0_32], %37 {strides = array<i32>} : memref<1x8x256xf32, #tpu.memory_space<vmem>>, vector<1x8x256xf32>,
    } else {
    }
    %c0 = arith.constant 0 : index
    %c0_1 = arith.constant 0 : index
    %c0_2 = arith.constant 0 : index
    %3 = vector.load %arg4[%c0, %c0_1, %c0_2] : memref<1x8x256xf32, #tpu.memory_space<vmem>>, vector<1x8x256xf32>
    %4 = vector.shape_cast %3 : vector<1x8x256xf32> to vector<8x256xf32>
    %c0_3 = arith.constant 0 : index
    %c0_4 = arith.constant 0 : index
    %c0_5 = arith.constant 0 : index
    %5 = vector.load %arg5[%c0_3, %c0_4, %c0_5] : memref<1x8x256xf32, #tpu.memory_space<vmem>>, vector<1x8x256xf32>
    %6 = vector.shape_cast %5 : vector<1x8x256xf32> to vector<8x256xf32>
    %c0_6 = arith.constant 0 : index
    %c0_7 = arith.constant 0 : index
    %c0_8 = arith.constant 0 : index
    %7 = vector.load %arg6[%c0_6, %c0_7, %c0_8] : memref<1x8x256xf32, #tpu.memory_space<vmem>>, vector<1x8x256xf32>
    %8 = vector.shape_cast %7 : vector<1x8x256xf32> to vector<8x256xf32>
    %c0_i32_9 = arith.constant 0 : i32
    %c256_i32 = arith.constant 256 : i32
    %9 = arith.muli %c0_i32_9, %c256_i32 : i32
    %10 = tpu.assume_multiple %9, 256 : i32
    %c0_10 = arith.constant 0 : index
    %11 = arith.index_cast %10 : i32 to index
    %12 = vector.load %arg2[%c0_10, %11] : memref<8x256xf32, #tpu.memory_space<vmem>>, vector<8x256xf32>
    %c0_11 = arith.constant 0 : index
    %13 = arith.index_cast %10 : i32 to index
    %14 = vector.load %arg3[%c0_11, %13] : memref<8x256xf32, #tpu.memory_space<vmem>>, vector<8x256xf32>
    %15 = arith.negf %12 : vector<8x256xf32>
    %16 = math.exp %15 : vector<8x256xf32>
    %cst = arith.constant 1.000000e+00 : f32
    %17 = vector.broadcast %cst : f32 to vector<8x256xf32>
    %18 = arith.addf %17, %16 : vector<8x256xf32>
    %19 = arith.divf %17, %18 : vector<8x256xf32>
    %20 = arith.mulf %19, %14 : vector<8x256xf32>
    %21 = arith.addf %4, %20 : vector<8x256xf32>
    %22 = arith.addf %6, %19 : vector<8x256xf32>
    %23 = arith.addf %8, %14 : vector<8x256xf32>
    %c1_i32 = arith.constant 1 : i32
    %c0_12 = arith.constant 0 : index
    %c0_13 = arith.constant 0 : index
    %c0_14 = arith.constant 0 : index
    %24 = vector.load %arg4[%c0_12, %c0_13, %c0_14] : memref<1x8x256xf32, #tpu.memory_space<vmem>>, vector<1x8x256xf32>
    %25 = vector.shape_cast %24 : vector<1x8x256xf32> to vector<8x256xf32>
    %26 = vector.shape_cast %21 : vector<8x256xf32> to vector<1x8x256xf32>
    tpu.vector_store %arg4[%c0_12, %c0_13, %c0_14], %26 {strides = array<i32>} : memref<1x8x256xf32, #tpu.memory_space<vmem>>, vector<1x8x256xf32>,
    %c0_15 = arith.constant 0 : index
    %c0_16 = arith.constant 0 : index
    %c0_17 = arith.constant 0 : index
    %27 = vector.load %arg5[%c0_15, %c0_16, %c0_17] : memref<1x8x256xf32, #tpu.memory_space<vmem>>, vector<1x8x256xf32>
    %28 = vector.shape_cast %27 : vector<1x8x256xf32> to vector<8x256xf32>
    %29 = vector.shape_cast %22 : vector<8x256xf32> to vector<1x8x256xf32>
    tpu.vector_store %arg5[%c0_15, %c0_16, %c0_17], %29 {strides = array<i32>} : memref<1x8x256xf32, #tpu.memory_space<vmem>>, vector<1x8x256xf32>,
    %c0_18 = arith.constant 0 : index
    %c0_19 = arith.constant 0 : index
    %c0_20 = arith.constant 0 : index
    %30 = vector.load %arg6[%c0_18, %c0_19, %c0_20] : memref<1x8x256xf32, #tpu.memory_space<vmem>>, vector<1x8x256xf32>
    %31 = vector.shape_cast %30 : vector<1x8x256xf32> to vector<8x256xf32>
    %32 = vector.shape_cast %23 : vector<8x256xf32> to vector<1x8x256xf32>
    tpu.vector_store %arg6[%c0_18, %c0_19, %c0_20], %32 {strides = array<i32>} : memref<1x8x256xf32, #tpu.memory_space<vmem>>, vector<1x8x256xf32>,
    return
  }
  func.func @transform_0(%arg0: i32, %arg1: i32) -> (i32, i32) {
    %c1_i32 = arith.constant 1 : i32
    %0 = arith.muli %arg0, %c1_i32 : i32
    %1 = arith.addi %0, %arg1 : i32
    %c0_i32 = arith.constant 0 : i32
    %c0_i32_0 = arith.constant 0 : i32
    return %c0_i32, %1 : i32, i32
  }
  func.func @transform_1(%arg0: i32, %arg1: i32) -> (i32, i32) {
    %c1_i32 = arith.constant 1 : i32
    %0 = arith.muli %arg0, %c1_i32 : i32
    %1 = arith.addi %0, %arg1 : i32
    %c0_i32 = arith.constant 0 : i32
    %c0_i32_0 = arith.constant 0 : i32
    return %c0_i32, %1 : i32, i32
  }
  func.func @transform_2(%arg0: i32, %arg1: i32) -> (i32, i32, i32) {
    %c0_i32 = arith.constant 0 : i32
    %c0_i32_0 = arith.constant 0 : i32
    %c0_i32_1 = arith.constant 0 : i32
    return %arg0, %c0_i32, %c0_i32_0 : i32, i32, i32
  }
  func.func @transform_3(%arg0: i32, %arg1: i32) -> (i32, i32, i32) {
    %c0_i32 = arith.constant 0 : i32
    %c0_i32_0 = arith.constant 0 : i32
    %c0_i32_1 = arith.constant 0 : i32
    return %arg0, %c0_i32, %c0_i32_0 : i32, i32, i32
  }
  func.func @transform_4(%arg0: i32, %arg1: i32) -> (i32, i32, i32) {
    %c0_i32 = arith.constant 0 : i32
    %c0_i32_0 = arith.constant 0 : i32
    %c0_i32_1 = arith.constant 0 : i32
    return %arg0, %c0_i32, %c0_i32_0 : i32, i32, i32
  }
}

</mosaic_0001>

<llo_original>
// kernel: tpu_custom_call.1
$region0: #{tpu_custom_call.1}
  #allocation0 [shape = 'u32[]', space=smem, size = 0x4, offset = 0x4, fixed_abs, tag = 'smem constant byte address 0x4 - core index']
  #allocation1 [shape = 'u32[72,128]{1,0:T(1,128)}', space=vmem, size = 0x9000, scoped, tag = 'internal scratch']
  %s0 = inlined_call_operand.hbm [shape: f32[8,256], index: 0, kind: input, shape index: {}]
  %s1 = inlined_call_operand.hbm [shape: f32[8,256], index: 1, kind: input, shape index: {}]
  %s2 = inlined_call_operand.hbm [shape: f32[1,8,256], index: 2, kind: output, shape index: {0}]
  %s3 = inlined_call_operand.hbm [shape: f32[1,8,256], index: 3, kind: output, shape index: {1}]
  %s4 = inlined_call_operand.hbm [shape: f32[1,8,256], index: 4, kind: output, shape index: {2}]
  %5 = xla_tuple %s2, %s3, %s4
  %s6 = sld [smem:[#allocation0]]
  $region46: #{tpu_custom_call.1} parent=0
    _
  %s8 = ssub.s32 1, %s6
  %s9 = scalar_select 0, %s8, %s6
  $region1: #{tpu_custom_call.1} parent=0
    #allocation2 [shape = 'u8[8192]{0}', space=vmem, size = 0x2000, scoped, tag = 'input window, operand 0, single buffered']
    #allocation3 [shape = 's32[1]{0}', space=sflag, size = 0x4, scoped, tag = 'scoped memory for tpu_custom_call.1']
    #allocation4 [shape = 's32[1]{0}', space=sflag, size = 0x4, scoped, tag = 'scoped memory for tpu_custom_call.1']
    #allocation5 [shape = 'u8[8192]{0}', space=vmem, size = 0x2000, scoped, tag = 'input window, operand 1, single buffered']
    #allocation6 [shape = 's32[1]{0}', space=sflag, size = 0x4, scoped, tag = 'scoped memory for tpu_custom_call.1']
    #allocation7 [shape = 'u8[8192]{0}', space=vmem, size = 0x2000, scoped, tag = 'output window, operand 0, single buffered']
    #allocation8 [shape = 'u8[8192]{0}', space=vmem, size = 0x2000, scoped, tag = 'output window, operand 1, single buffered']
    #allocation9 [shape = 's32[1]{0}', space=sflag, size = 0x4, scoped, tag = 'scoped memory for tpu_custom_call.1']
    #allocation10 [shape = 'u8[8192]{0}', space=vmem, size = 0x2000, scoped, tag = 'output window, operand 2, single buffered']
    %10 = vsyncpa [#allocation3], 0
    %11 = vsyncpa [#allocation6], 0
    %12 = vsyncpa [#allocation4], 0
    %13 = vsyncpa [#allocation9], 0
    // Predicated region
    $region2: #{tpu_custom_call.1} parent=1 // pred_check
      _
    $region3: #{tpu_custom_call.1} parent=1 // pred_check_branch
      %15 = sbr.rel (0) target = $region5
    $region4: #{tpu_custom_call.1} parent=1 // pred_region
      %s16 = sadd.s32 0, 0
      %s17 = smul.u32 2, %s16
      %19 = vsyncadd [#allocation3], 0
      %s20 = smul.addr %s17, 8
      %s21 = scalar_lea.hbm %s0, %s20
      %s23 = sshll.u32 %s21, 4
      %s24 = int_to_ptr.hbm [resolvable:$true] %s23
      %s25 = sshll.u32 [#allocation2], 4
      %s26 = int_to_ptr.vmem [resolvable:$true] %s25
      %28 = dma.hbm_to_vmem [thread:$0]  %s24, 256, %s26, [#allocation3]
    $region5: #{tpu_custom_call.1} parent=1 // pred_fallthru
      _
    // Predicated region
    $region6: #{tpu_custom_call.1} parent=1 // pred_check
      _
    $region7: #{tpu_custom_call.1} parent=1 // pred_check_branch
      %30 = sbr.rel (0) target = $region9
    $region8: #{tpu_custom_call.1} parent=1 // pred_region
      %s31 = sadd.s32 0, 0
      %s32 = smul.u32 2, %s31
      %34 = vsyncadd [#allocation6], 0
      %s35 = smul.addr %s32, 8
      %s36 = scalar_lea.hbm %s1, %s35
      %s38 = sshll.u32 %s36, 4
      %s39 = int_to_ptr.hbm [resolvable:$true] %s38
      %s40 = sshll.u32 [#allocation5], 4
      %s41 = int_to_ptr.vmem [resolvable:$true] %s40
      %43 = dma.hbm_to_vmem [thread:$0]  %s39, 256, %s41, [#allocation6]
    $region9: #{tpu_custom_call.1} parent=1 // pred_fallthru
      _
    // Predicated region
    $region10: #{tpu_custom_call.1} parent=1 // pred_check
      _
    $region11: #{tpu_custom_call.1} parent=1 // pred_check_branch
      %45 = sbr.rel (0) target = $region13
    $region12: #{tpu_custom_call.1} parent=1 // pred_region
      %47 = dma.done [#allocation3], 256
    $region13: #{tpu_custom_call.1} parent=1 // pred_fallthru
      _
    // Predicated region
    $region14: #{tpu_custom_call.1} parent=1 // pred_check
      _
    $region15: #{tpu_custom_call.1} parent=1 // pred_check_branch
      %49 = sbr.rel (0) target = $region17
    $region16: #{tpu_custom_call.1} parent=1 // pred_region
      %51 = dma.done [#allocation6], 256
    $region17: #{tpu_custom_call.1} parent=1 // pred_fallthru
      _
    %s52 = sadd.s32 0, 0
    %s53 = smul.u32 2, %s52
    %s54 = sadd.s32 0, 0
    %s55 = smul.u32 2, %s54
    %p56 = scmp.eq.s32.totalorder 0, 0
    // Predicated region
    $region18: #{tpu_custom_call.1} parent=1 // pred_check
      %p57 = pneg %p56
    $region19: #{tpu_custom_call.1} parent=1 // pred_check_branch
      %59 = sbr.rel (%p57) target = $region21
    $region20: #{tpu_custom_call.1} parent=1 // pred_region
      %60 = vst [vmem:[#allocation7] sm:$0xff] 0.0
      %61 = vst [vmem:[#allocation7 + $0x8] sm:$0xff] 0.0
      %62 = vst [vmem:[#allocation8] sm:$0xff] 0.0
      %63 = vst [vmem:[#allocation8 + $0x8] sm:$0xff] 0.0
      %64 = vst [vmem:[#allocation10] sm:$0xff] 0.0
      %65 = vst [vmem:[#allocation10 + $0x8] sm:$0xff] 0.0
    $region21: #{tpu_custom_call.1} parent=1 // pred_fallthru
      _
    %v66 = vld [vmem:[#allocation7] sm:$0xff]
    %v67 = vld [vmem:[#allocation7 + $0x8] sm:$0xff]
    %v68 = vld [vmem:[#allocation8] sm:$0xff]
    %v69 = vld [vmem:[#allocation8 + $0x8] sm:$0xff]
    %v70 = vld [vmem:[#allocation10] sm:$0xff]
    %v71 = vld [vmem:[#allocation10 + $0x8] sm:$0xff]
    %v72 = vld [vmem:[#allocation2] sm:$0xff]
    %v73 = vld [vmem:[#allocation2 + $0x8] sm:$0xff]
    %v74 = vld [vmem:[#allocation5] sm:$0xff]
    %v75 = vld [vmem:[#allocation5 + $0x8] sm:$0xff]
    %v76 = vxor.u32 %v72, 2147483648
    %v77 = vxor.u32 %v73, 2147483648
    %v78 = vmul.f32 %v76, 1.442695
    %v79 = vpow.pop %v78
    %v80 = vmul.f32 %v77, 1.442695
    %v81 = vpow.pop %v80
    %v82 = vadd.f32 %v79, 1.0
    %v83 = vadd.f32 %v81, 1.0
    %v84 = vrcp.pop %v82
    %v85 = vmul.f32 %v82, %v84
    %v86 = vsub.f32 1.0, %v85
    %v87 = vmul.f32 %v84, %v86
    %v88 = vadd.f32 %v84, %v87
    %vm89 = vweird.f32 %v82
    %vm90 = vweird.f32 %v84
    %vm91 = vmor %vm89, %vm90
    %v92 = vsel %vm91, %v84, %v88
    %v93 = vand.u32 2147483647, %v82
    %vm94 = vcmp.eq.f32.partialorder %v93, 8.507059e+37
    %v95 = vand.u32 %v82, 2147483648
    %v96 = vor.u32 1.1754944e-38, %v95
    %v97 = vsel %vm94, %v96, %v92
    %v98 = vmul.f32 1.0, %v97
    %v99 = vrcp.pop %v83
    %v100 = vmul.f32 %v83, %v99
    %v101 = vsub.f32 1.0, %v100
    %v102 = vmul.f32 %v99, %v101
    %v103 = vadd.f32 %v99, %v102
    %vm104 = vweird.f32 %v83
    %vm105 = vweird.f32 %v99
    %vm106 = vmor %vm104, %vm105
    %v107 = vsel %vm106, %v99, %v103
    %v108 = vand.u32 2147483647, %v83
    %vm109 = vcmp.eq.f32.partialorder %v108, 8.507059e+37
    %v110 = vand.u32 %v83, 2147483648
    %v111 = vor.u32 1.1754944e-38, %v110
    %v112 = vsel %vm109, %v111, %v107
    %v113 = vmul.f32 1.0, %v112
    %v114 = vmul.f32 %v98, %v74
    %v115 = vmul.f32 %v113, %v75
    %v116 = vadd.f32 %v66, %v114
    %v117 = vadd.f32 %v67, %v115
    %v118 = vadd.f32 %v68, %v98
    %v119 = vadd.f32 %v69, %v113
    %v120 = vadd.f32 %v70, %v74
    %v121 = vadd.f32 %v71, %v75
    %122 = vst [vmem:[#allocation7] sm:$0xff] %v116
    %123 = vst [vmem:[#allocation7 + $0x8] sm:$0xff] %v117
    %124 = vst [vmem:[#allocation8] sm:$0xff] %v118
    %125 = vst [vmem:[#allocation8 + $0x8] sm:$0xff] %v119
    %126 = vst [vmem:[#allocation10] sm:$0xff] %v120
    %127 = vst [vmem:[#allocation10 + $0x8] sm:$0xff] %v121
    // Predicated region
    $region22: #{tpu_custom_call.1} parent=1 // pred_check
      _
    $region23: #{tpu_custom_call.1} parent=1 // pred_check_branch
      %129 = sbr.rel (0) target = $region25
    $region24: #{tpu_custom_call.1} parent=1 // pred_region
      %131 = vsyncadd [#allocation4], 0
      %s133 = sshll.u32 [#allocation7], 4
      %s134 = int_to_ptr.vmem [resolvable:$true] %s133
      %s135 = sshll.u32 %s2, 4
      %s136 = int_to_ptr.hbm [resolvable:$true] %s135
      %138 = dma.vmem_to_hbm [thread:$0]  %s134, 256, %s136, [#allocation4]
    $region25: #{tpu_custom_call.1} parent=1 // pred_fallthru
      _
    // Predicated region
    $region26: #{tpu_custom_call.1} parent=1 // pred_check
      _
    $region27: #{tpu_custom_call.1} parent=1 // pred_check_branch
      %140 = sbr.rel (0) target = $region29
    $region28: #{tpu_custom_call.1} parent=1 // pred_region
      %142 = vsyncadd [#allocation9], 0
      %s144 = sshll.u32 [#allocation8], 4
      %s145 = int_to_ptr.vmem [resolvable:$true] %s144
      %s146 = sshll.u32 %s3, 4
      %s147 = int_to_ptr.hbm [resolvable:$true] %s146
      %149 = dma.vmem_to_hbm [thread:$0]  %s145, 256, %s147, [#allocation9]
    $region29: #{tpu_custom_call.1} parent=1 // pred_fallthru
      _
    // Predicated region
    $region30: #{tpu_custom_call.1} parent=1 // pred_check
      _
    $region31: #{tpu_custom_call.1} parent=1 // pred_check_branch
      %151 = sbr.rel (0) target = $region33
    $region32: #{tpu_custom_call.1} parent=1 // pred_region
      %153 = vsyncadd [#allocation9], 0
      %s155 = sshll.u32 [#allocation10], 4
      %s156 = int_to_ptr.vmem [resolvable:$true] %s155
      %s157 = sshll.u32 %s4, 4
      %s158 = int_to_ptr.hbm [resolvable:$true] %s157
      %160 = dma.vmem_to_hbm [thread:$0]  %s156, 256, %s158, [#allocation9]
    $region33: #{tpu_custom_call.1} parent=1 // pred_fallthru
      _
    // Predicated region
    $region34: #{tpu_custom_call.1} parent=1 // pred_check
      _
    $region35: #{tpu_custom_call.1} parent=1 // pred_check_branch
      %162 = sbr.rel (0) target = $region37
    $region36: #{tpu_custom_call.1} parent=1 // pred_region
      %164 = dma.done [#allocation4], 256
    $region37: #{tpu_custom_call.1} parent=1 // pred_fallthru
      _
    // Predicated region
    $region38: #{tpu_custom_call.1} parent=1 // pred_check
      _
    $region39: #{tpu_custom_call.1} parent=1 // pred_check_branch
      %166 = sbr.rel (0) target = $region41
    $region40: #{tpu_custom_call.1} parent=1 // pred_region
      %168 = dma.done [#allocation9], 256
    $region41: #{tpu_custom_call.1} parent=1 // pred_fallthru
      _
    // Predicated region
    $region42: #{tpu_custom_call.1} parent=1 // pred_check
      _
    $region43: #{tpu_custom_call.1} parent=1 // pred_check_branch
      %170 = sbr.rel (0) target = $region45
    $region44: #{tpu_custom_call.1} parent=1 // pred_region
      %172 = dma.done [#allocation9], 256
    $region45: #{tpu_custom_call.1} parent=1 // pred_fallthru
      _
    %173 = vsyncpa [#allocation3], 1
    %174 = vsyncpa [#allocation6], 1
    %175 = vsyncpa [#allocation4], 1
    %176 = vsyncpa [#allocation9], 1

</llo_original>
